<compile_context>
chip_gen: v7x
topology: tpu7x:2x2x1
jax: 0.10.0
libtpu: 0.0.40
codegen_flags: <defaults>
</compile_context>

<pallas_src>
import functools

import jax
import jax.numpy as jnp
from jax import lax
from jax.experimental import pallas as pl
from jax.experimental.pallas import tpu as pltpu

# TODO(synk): SolverParams().stability_scale is not defined in the snippet;
# use a deterministic stand-in constant (baked into the kernel at trace time).
SCALE_N = 1.0

_SUB = 256        # lane width of the batch sub-tile processed per inner step
_MAX_TILE = 2048  # cap on the DMA'd batch tile (VMEM / double-buffering modest)


def _round_up(x, m):
    return ((x + m - 1) // m) * m


def _choose_tile(batch):
    """Batch rows per grid step (multiple of 128; >=256 => multiple of _SUB)."""
    bp = _round_up(batch, 128)
    if bp <= _SUB:
        return bp                     # 128 or 256: a single block, sub == tile
    if bp <= 2 * _SUB:
        return _SUB                   # two 256-row blocks (feeds both TCs on v7x)
    # Aim for >= 2 grid steps (v7x megacore) with tiles big enough to sit near
    # the HBM roofline; cap so vreg/VMEM pressure stays comfortable.
    target = _round_up(pl.cdiv(bp, 2), _SUB)
    return min(_MAX_TILE, target)


def _sigmoid(z):
    # Single EUP transcendental (tanh) instead of exp + reciprocal.
    return 0.5 * jnp.tanh(0.5 * z) + 0.5


def mlp_kernel(x_ref, w1_ref, b1_ref, w2_ref, b2_ref, w3_ref, b3_ref, o_ref,
               *, scale, sub):
    # Hoist the VMEM-resident weights/biases out of the sub-tile loop.
    w1 = w1_ref[...]; b1 = b1_ref[...]      # (D1, D0), (D1, 1)
    w2 = w2_ref[...]; b2 = b2_ref[...]      # (D2, D1), (D2, 1)
    w3 = w3_ref[...]; b3 = b3_ref[...]      # (D3, D2), (D3, 1)

    n_sub = o_ref.shape[0] // sub

    def body(j, carry):
        row = pl.multiple_of(j * sub, sub)
        x_blk = x_ref[pl.ds(row, sub), :]                                # (sub, D0)
        # First layer contracts over D0 of the native-layout x block (W1 @ x^T),
        # putting the batch on the fast lane axis for the rest of the compute.
        h1 = _sigmoid(
            lax.dot_general(w1, x_blk, (((1,), (1,)), ((), ())),
                            preferred_element_type=jnp.float32) + b1)   # (D1, sub)
        h2 = _sigmoid(
            jnp.dot(w2, h1, preferred_element_type=jnp.float32) + b2)   # (D2, sub)
        outT = (jnp.dot(w3, h2, preferred_element_type=jnp.float32)
                + b3) * scale                                           # (D3, sub)
        # Tiny (D3, sub) -> (sub, D3) transpose rides the XLU slot; store
        # straight into the native-layout (B, D3) output block.
        o_ref[pl.ds(row, sub), :] = outT.T.astype(o_ref.dtype)
        return carry

    lax.fori_loop(0, n_sub, body, 0, unroll=True)


@functools.partial(jax.jit, static_argnames=("scale",))
def mlp_forward(x, w1, b1, w2, b2, w3, b3, *, scale=SCALE_N):
    """x: (B, D0); w_i: (D_i, D_{i-1}) as in nn.Linear; b_i: (D_i, 1)."""
    B, D0 = x.shape
    D1, D2, D3 = w1.shape[0], w2.shape[0], w3.shape[0]

    tile = _choose_tile(B)
    sub = min(_SUB, tile)
    grid = (pl.cdiv(B, tile),)

    kernel = functools.partial(mlp_kernel, scale=float(scale), sub=sub)
    resident = lambda shape: pl.BlockSpec(shape, lambda i: (0, 0))

    return pl.pallas_call(
        kernel,
        out_shape=jax.ShapeDtypeStruct((B, D3), x.dtype),
        grid=grid,
        in_specs=[
            pl.BlockSpec((tile, D0), lambda i: (i, 0)),   # x tile (streamed, native layout)
            resident((D1, D0)), resident((D1, 1)),        # W1, b1 (VMEM resident)
            resident((D2, D1)), resident((D2, 1)),        # W2, b2
            resident((D3, D2)), resident((D3, 1)),        # W3, b3
        ],
        out_specs=pl.BlockSpec((tile, D3), lambda i: (i, 0)),
        compiler_params=pltpu.CompilerParams(
            dimension_semantics=("parallel",)),
    )(x, w1, b1, w2, b2, w3, b3)


def init_linear(key, fan_in, fan_out):
    """Deterministic init mimicking nn.Linear (uniform +/- 1/sqrt(fan_in)).
    Weight in PyTorch layout (fan_out, fan_in); bias stored as (fan_out, 1)."""
    kw, kb = jax.random.split(key)
    bound = 1.0 / jnp.sqrt(fan_in)
    w = jax.random.uniform(kw, (fan_out, fan_in), jnp.float32, -bound, bound)
    b = jax.random.uniform(kb, (fan_out, 1), jnp.float32, -bound, bound)
    return w, b


def _reference(x, w1, b1, w2, b2, w3, b3, scale):
    h = jax.nn.sigmoid(x @ w1.T + b1.T)
    h = jax.nn.sigmoid(h @ w2.T + b2.T)
    return (h @ w3.T + b3.T) * scale


if __name__ == "__main__":
    layers = [16, 32, 32, 8]          # layers[0..3] as in MLP(layers)
    key = jax.random.PRNGKey(0)
    kx, k1, k2, k3, kr = jax.random.split(key, 5)

    w1, b1 = init_linear(k1, layers[0], layers[1])
    w2, b2 = init_linear(k2, layers[1], layers[2])
    w3, b3 = init_linear(k3, layers[2], layers[3])

    # Main check: batch splits into two 256-row grid steps (exercises the grid
    # and both TensorCores on v7x).
    batch = 512
    x = jax.random.normal(kx, (batch, layers[0]), jnp.float32)
    out = mlp_forward(x, w1, b1, w2, b2, w3, b3)
    jax.block_until_ready(out)
    ref = _reference(x, w1, b1, w2, b2, w3, b3, SCALE_N)
    assert out.shape == (batch, layers[3])
    assert jnp.allclose(out, ref, atol=1e-4, rtol=1e-4), "mismatch (batch=512)"

    # Ragged-batch check: last block reads padded rows, which flow through the
    # activations but must never contaminate (or NaN-leak into) valid rows.
    batch_r = 200
    xr = jax.random.normal(kr, (batch_r, layers[0]), jnp.float32)
    out_r = mlp_forward(xr, w1, b1, w2, b2, w3, b3)
    jax.block_until_ready(out_r)
    ref_r = _reference(xr, w1, b1, w2, b2, w3, b3, SCALE_N)
    assert out_r.shape == (batch_r, layers[3])
    assert jnp.allclose(out_r, ref_r, atol=1e-4, rtol=1e-4), "mismatch (ragged batch)"
    assert bool(jnp.all(jnp.isfinite(out_r))), "NaN/Inf leaked from padded block"

    print("KERNEL_OK")
</pallas_src>

<mosaic_0001>
module attributes {stable_mosaic.version = 11 : i64} {
  func.func @mlp_kernel(%arg0: i32, %arg1: memref<256x16xf32, #tpu.memory_space<vmem>>, %arg2: memref<32x16xf32, #tpu.memory_space<vmem>>, %arg3: memref<32x1xf32, #tpu.memory_space<vmem>>, %arg4: memref<32x32xf32, #tpu.memory_space<vmem>>, %arg5: memref<32x1xf32, #tpu.memory_space<vmem>>, %arg6: memref<8x32xf32, #tpu.memory_space<vmem>>, %arg7: memref<8x1xf32, #tpu.memory_space<vmem>>, %arg8: memref<256x8xf32, #tpu.memory_space<vmem>>) attributes {dimension_semantics = [#tpu.dimension_semantics<parallel>], iteration_bounds = array<i64: 2>, scalar_prefetch = 0 : i64, scratch_operands = 0 : i64, tpu.core_type = #tpu.core_type<tc>, window_params = [{transform_indices = @transform_0, window_bounds = array<i64: 256, 16>}, {pipeline_mode = #tpu.pipeline_mode<synchronous>, transform_indices = @transform_1, window_bounds = array<i64: 32, 16>}, {pipeline_mode = #tpu.pipeline_mode<synchronous>, transform_indices = @transform_2, window_bounds = array<i64: 32, 1>}, {pipeline_mode = #tpu.pipeline_mode<synchronous>, transform_indices = @transform_3, window_bounds = array<i64: 32, 32>}, {pipeline_mode = #tpu.pipeline_mode<synchronous>, transform_indices = @transform_4, window_bounds = array<i64: 32, 1>}, {pipeline_mode = #tpu.pipeline_mode<synchronous>, transform_indices = @transform_5, window_bounds = array<i64: 8, 32>}, {pipeline_mode = #tpu.pipeline_mode<synchronous>, transform_indices = @transform_6, window_bounds = array<i64: 8, 1>}, {transform_indices = @transform_7, window_bounds = array<i64: 256, 8>}]} {
    %c0 = arith.constant 0 : index
    %c0_0 = arith.constant 0 : index
    %0 = vector.load %arg2[%c0, %c0_0] : memref<32x16xf32, #tpu.memory_space<vmem>>, vector<32x16xf32>
    %c0_1 = arith.constant 0 : index
    %c0_2 = arith.constant 0 : index
    %1 = vector.load %arg3[%c0_1, %c0_2] : memref<32x1xf32, #tpu.memory_space<vmem>>, vector<32x1xf32>
    %c0_3 = arith.constant 0 : index
    %c0_4 = arith.constant 0 : index
    %2 = vector.load %arg4[%c0_3, %c0_4] : memref<32x32xf32, #tpu.memory_space<vmem>>, vector<32x32xf32>
    %c0_5 = arith.constant 0 : index
    %c0_6 = arith.constant 0 : index
    %3 = vector.load %arg5[%c0_5, %c0_6] : memref<32x1xf32, #tpu.memory_space<vmem>>, vector<32x1xf32>
    %c0_7 = arith.constant 0 : index
    %c0_8 = arith.constant 0 : index
    %4 = vector.load %arg6[%c0_7, %c0_8] : memref<8x32xf32, #tpu.memory_space<vmem>>, vector<8x32xf32>
    %c0_9 = arith.constant 0 : index
    %c0_10 = arith.constant 0 : index
    %5 = vector.load %arg7[%c0_9, %c0_10] : memref<8x1xf32, #tpu.memory_space<vmem>>, vector<8x1xf32>
    %c0_i32 = arith.constant 0 : i32
    %c256_i32 = arith.constant 256 : i32
    %6 = arith.muli %c0_i32, %c256_i32 : i32
    %7 = tpu.assume_multiple %6, 256 : i32
    %8 = arith.index_cast %7 : i32 to index
    %c0_11 = arith.constant 0 : index
    %9 = vector.load %arg1[%8, %c0_11] : memref<256x16xf32, #tpu.memory_space<vmem>>, vector<256x16xf32>
    %cst = arith.constant dense<0.000000e+00> : vector<32x256xf32>
    %10 = tpu.matmul %0, %9, %cst {dimension_numbers = #tpu.dot_dimension_numbers<[1], [1], [0], [0], [0, 0, 1, 0], [], []>} : vector<32x16xf32>, vector<256x16xf32>, vector<32x256xf32> -> vector<32x256xf32>
    %11 = vector.broadcast %1 : vector<32x1xf32> to vector<32x256xf32>
    %12 = arith.addf %10, %11 : vector<32x256xf32>
    %cst_12 = arith.constant 5.000000e-01 : f32
    %13 = vector.broadcast %cst_12 : f32 to vector<32x256xf32>
    %14 = arith.mulf %13, %12 : vector<32x256xf32>
    %15 = math.tanh %14 : vector<32x256xf32>
    %cst_13 = arith.constant 5.000000e-01 : f32
    %16 = vector.broadcast %cst_13 : f32 to vector<32x256xf32>
    %17 = arith.mulf %16, %15 : vector<32x256xf32>
    %cst_14 = arith.constant 5.000000e-01 : f32
    %18 = vector.broadcast %cst_14 : f32 to vector<32x256xf32>
    %19 = arith.addf %17, %18 : vector<32x256xf32>
    %cst_15 = arith.constant dense<0.000000e+00> : vector<32x256xf32>
    %20 = tpu.matmul %2, %19, %cst_15 {dimension_numbers = #tpu.dot_dimension_numbers<[1], [0], [0], [1], [0, 0, 1, 1], [], []>} : vector<32x32xf32>, vector<32x256xf32>, vector<32x256xf32> -> vector<32x256xf32>
    %21 = vector.broadcast %3 : vector<32x1xf32> to vector<32x256xf32>
    %22 = arith.addf %20, %21 : vector<32x256xf32>
    %cst_16 = arith.constant 5.000000e-01 : f32
    %23 = vector.broadcast %cst_16 : f32 to vector<32x256xf32>
    %24 = arith.mulf %23, %22 : vector<32x256xf32>
    %25 = math.tanh %24 : vector<32x256xf32>
    %cst_17 = arith.constant 5.000000e-01 : f32
    %26 = vector.broadcast %cst_17 : f32 to vector<32x256xf32>
    %27 = arith.mulf %26, %25 : vector<32x256xf32>
    %cst_18 = arith.constant 5.000000e-01 : f32
    %28 = vector.broadcast %cst_18 : f32 to vector<32x256xf32>
    %29 = arith.addf %27, %28 : vector<32x256xf32>
    %cst_19 = arith.constant dense<0.000000e+00> : vector<8x256xf32>
    %30 = tpu.matmul %4, %29, %cst_19 {dimension_numbers = #tpu.dot_dimension_numbers<[1], [0], [0], [1], [0, 0, 1, 1], [], []>} : vector<8x32xf32>, vector<32x256xf32>, vector<8x256xf32> -> vector<8x256xf32>
    %31 = vector.broadcast %5 : vector<8x1xf32> to vector<8x256xf32>
    %32 = arith.addf %30, %31 : vector<8x256xf32>
    %cst_20 = arith.constant 1.000000e+00 : f32
    %33 = vector.broadcast %cst_20 : f32 to vector<8x256xf32>
    %34 = arith.mulf %32, %33 : vector<8x256xf32>
    %35 = tpu.transpose %34, [1, 0] : vector<8x256xf32> -> vector<256x8xf32>
    %36 = arith.index_cast %7 : i32 to index
    %c0_21 = arith.constant 0 : index
    %37 = vector.load %arg8[%36, %c0_21] : memref<256x8xf32, #tpu.memory_space<vmem>>, vector<256x8xf32>
    tpu.vector_store %arg8[%36, %c0_21], %35 {strides = array<i32>} : memref<256x8xf32, #tpu.memory_space<vmem>>, vector<256x8xf32>,
    %c1_i32 = arith.constant 1 : i32
    return
  }
  func.func @transform_0(%arg0: i32) -> (i32, i32) {
    %c0_i32 = arith.constant 0 : i32
    %c0_i32_0 = arith.constant 0 : i32
    return %arg0, %c0_i32 : i32, i32
  }
  func.func @transform_1(%arg0: i32) -> (i32, i32) {
    %c0_i32 = arith.constant 0 : i32
    %c0_i32_0 = arith.constant 0 : i32
    %c0_i32_1 = arith.constant 0 : i32
    return %c0_i32, %c0_i32_0 : i32, i32
  }
  func.func @transform_2(%arg0: i32) -> (i32, i32) {
    %c0_i32 = arith.constant 0 : i32
    %c0_i32_0 = arith.constant 0 : i32
    %c0_i32_1 = arith.constant 0 : i32
    return %c0_i32, %c0_i32_0 : i32, i32
  }
  func.func @transform_3(%arg0: i32) -> (i32, i32) {
    %c0_i32 = arith.constant 0 : i32
    %c0_i32_0 = arith.constant 0 : i32
    %c0_i32_1 = arith.constant 0 : i32
    return %c0_i32, %c0_i32_0 : i32, i32
  }
  func.func @transform_4(%arg0: i32) -> (i32, i32) {
    %c0_i32 = arith.constant 0 : i32
    %c0_i32_0 = arith.constant 0 : i32
    %c0_i32_1 = arith.constant 0 : i32
    return %c0_i32, %c0_i32_0 : i32, i32
  }
  func.func @transform_5(%arg0: i32) -> (i32, i32) {
    %c0_i32 = arith.constant 0 : i32
    %c0_i32_0 = arith.constant 0 : i32
    %c0_i32_1 = arith.constant 0 : i32
    return %c0_i32, %c0_i32_0 : i32, i32
  }
  func.func @transform_6(%arg0: i32) -> (i32, i32) {
    %c0_i32 = arith.constant 0 : i32
    %c0_i32_0 = arith.constant 0 : i32
    %c0_i32_1 = arith.constant 0 : i32
    return %c0_i32, %c0_i32_0 : i32, i32
  }
  func.func @transform_7(%arg0: i32) -> (i32, i32) {
    %c0_i32 = arith.constant 0 : i32
    %c0_i32_0 = arith.constant 0 : i32
    return %arg0, %c0_i32 : i32, i32
  }
}

</mosaic_0001>

<llo_original>
// kernel: mlp_forward.1
$region0: #{mlp_forward.1}
  #allocation0 [shape = 'u32[]', space=smem, size = 0x4, offset = 0x4, fixed_abs, tag = 'smem constant byte address 0x4 - core index']
  #allocation1 [shape = 'u32[144,128]{1,0:T(1,128)}', space=vmem, size = 0x12000, scoped, tag = 'internal scratch']
  %s0 = inlined_call_operand.vmem [shape: f32[512,16], index: 0, kind: input, shape index: {}]
  %s1 = inlined_call_operand.vmem [shape: f32[32,16], index: 1, kind: input, shape index: {}]
  %s2 = inlined_call_operand.vmem [shape: f32[32,1], index: 2, kind: input, shape index: {}]
  %s3 = inlined_call_operand.vmem [shape: f32[32,32], index: 3, kind: input, shape index: {}]
  %s4 = inlined_call_operand.vmem [shape: f32[32,1], index: 4, kind: input, shape index: {}]
  %s5 = inlined_call_operand.vmem [shape: f32[8,32], index: 5, kind: input, shape index: {}]
  %s6 = inlined_call_operand.vmem [shape: f32[8,1], index: 6, kind: input, shape index: {}]
  %s7 = inlined_call_operand.vmem [shape: f32[512,8], index: 7, kind: output, shape index: {}]
  %s8 = sld [smem:[#allocation0]]
  $region61: #{mlp_forward.1} parent=0
    _
  %s10 = ssub.s32 1, %s8
  %s11 = scalar_select 0, %s10, %s8
  loop: start=0, step=1, limit=4
  $region2: #{mlp_forward.1} parent=0 // loop_pre_header
    _
  $region3: #{mlp_forward.1} parent=0 // loop_header
    %s13 = sphi 0, %s17
    %p14 = scmp.ge.s32.totalorder %s13, 4
    %s23 = sphi 0, %s25
    %s26 = sphi 0, %s23
    %s27 = sphi 0, %s26
    %s43 = sphi 0, %s27
    %s47 = sphi 0, %s47
    %s49 = sphi 0, %s47
    %s50 = sphi 0, %s49
    %s64 = sphi 0, %s50
    %s68 = sphi 0, %s68
    %s70 = sphi 0, %s68
    %s71 = sphi 0, %s70
    %s85 = sphi 0, %s71
    %s89 = sphi 0, %s89
    %s91 = sphi 0, %s89
    %s92 = sphi 0, %s91
    %s106 = sphi 0, %s92
    %s110 = sphi 0, %s110
    %s112 = sphi 0, %s110
    %s113 = sphi 0, %s112
    %s127 = sphi 0, %s113
    %s131 = sphi 0, %s131
    %s133 = sphi 0, %s131
    %s134 = sphi 0, %s133
    %s148 = sphi 0, %s134
    %s152 = sphi 0, %s152
    %s154 = sphi 0, %s152
    %s155 = sphi 0, %s154
    %s169 = sphi 0, %s155
    %s175 = sphi 0, %s177
    %s178 = sphi 0, %s175
    %s179 = sphi 0, %s178
    %s195 = sphi 0, %s179
  $region4: #{mlp_forward.1} parent=0 // loop_header_branch
    %16 = sbr.rel (%p14) target = $region8
  $region5: #{mlp_forward.1} parent=0 // loop_body
    %s18 = ssub.s32 %s13, 1
    %s19 = ssub.s32 %s13, 2
    %s20 = sadd.s32 %s13, 1
    %s21 = ssub.s32 %s13, %s20
    %p22 = scmp.eq.s32.totalorder %s21, 0
    %s24 = sadd.s32 %s23, 1
    %s25 = scalar_select %p22, %s23, %s24
    %p28 = pneg %p22
    %p29 = scmp.eq.s32.totalorder %s13, 1
    %p30 = por %p28, %p29
    %p31 = scmp.ne.s32.totalorder %s23, %s26
    %p32 = scmp.eq.s32.totalorder %s13, 0
    %p33 = por %p31, %p32
    %p34 = scmp.ne.s32.totalorder %s23, %s26
    %p35 = scmp.eq.s32.totalorder %s18, 1
    %p36 = por %p34, %p35
    %p37 = scmp.ne.s32.totalorder %s26, %s27
    %p38 = scmp.eq.s32.totalorder %s18, 0
    %p39 = por %p37, %p38
    %p40 = scmp.ne.s32.totalorder %s26, %s27
    %p41 = scmp.eq.s32.totalorder %s19, 1
    %p42 = por %p40, %p41
    %p44 = scmp.ne.s32.totalorder %s27, %s43
    %p45 = scmp.eq.s32.totalorder %s19, 0
    %p46 = por %p44, %p45
    %s48 = sadd.s32 %s47, 1
    %p51 = scmp.eq.s32.totalorder %s13, 1
    %p52 = scmp.ne.s32.totalorder %s47, %s49
    %p53 = scmp.eq.s32.totalorder %s13, 0
    %p54 = por %p52, %p53
    %p55 = scmp.ne.s32.totalorder %s47, %s49
    %p56 = scmp.eq.s32.totalorder %s18, 1
    %p57 = por %p55, %p56
    %p58 = scmp.ne.s32.totalorder %s49, %s50
    %p59 = scmp.eq.s32.totalorder %s18, 0
    %p60 = por %p58, %p59
    %p61 = scmp.ne.s32.totalorder %s49, %s50
    %p62 = scmp.eq.s32.totalorder %s19, 1
    %p63 = por %p61, %p62
    %p65 = scmp.ne.s32.totalorder %s50, %s64
    %p66 = scmp.eq.s32.totalorder %s19, 0
    %p67 = por %p65, %p66
    %s69 = sadd.s32 %s68, 1
    %p72 = scmp.eq.s32.totalorder %s13, 1
    %p73 = scmp.ne.s32.totalorder %s68, %s70
    %p74 = scmp.eq.s32.totalorder %s13, 0
    %p75 = por %p73, %p74
    %p76 = scmp.ne.s32.totalorder %s68, %s70
    %p77 = scmp.eq.s32.totalorder %s18, 1
    %p78 = por %p76, %p77
    %p79 = scmp.ne.s32.totalorder %s70, %s71
    %p80 = scmp.eq.s32.totalorder %s18, 0
    %p81 = por %p79, %p80
    %p82 = scmp.ne.s32.totalorder %s70, %s71
    %p83 = scmp.eq.s32.totalorder %s19, 1
    %p84 = por %p82, %p83
    %p86 = scmp.ne.s32.totalorder %s71, %s85
    %p87 = scmp.eq.s32.totalorder %s19, 0
    %p88 = por %p86, %p87
    %s90 = sadd.s32 %s89, 1
    %p93 = scmp.eq.s32.totalorder %s13, 1
    %p94 = scmp.ne.s32.totalorder %s89, %s91
    %p95 = scmp.eq.s32.totalorder %s13, 0
    %p96 = por %p94, %p95
    %p97 = scmp.ne.s32.totalorder %s89, %s91
    %p98 = scmp.eq.s32.totalorder %s18, 1
    %p99 = por %p97, %p98
    %p100 = scmp.ne.s32.totalorder %s91, %s92
    %p101 = scmp.eq.s32.totalorder %s18, 0
    %p102 = por %p100, %p101
    %p103 = scmp.ne.s32.totalorder %s91, %s92
    %p104 = scmp.eq.s32.totalorder %s19, 1
    %p105 = por %p103, %p104
    %p107 = scmp.ne.s32.totalorder %s92, %s106
    %p108 = scmp.eq.s32.totalorder %s19, 0
    %p109 = por %p107, %p108
    %s111 = sadd.s32 %s110, 1
    %p114 = scmp.eq.s32.totalorder %s13, 1
    %p115 = scmp.ne.s32.totalorder %s110, %s112
    %p116 = scmp.eq.s32.totalorder %s13, 0
    %p117 = por %p115, %p116
    %p118 = scmp.ne.s32.totalorder %s110, %s112
    %p119 = scmp.eq.s32.totalorder %s18, 1
    %p120 = por %p118, %p119
    %p121 = scmp.ne.s32.totalorder %s112, %s113
    %p122 = scmp.eq.s32.totalorder %s18, 0
    %p123 = por %p121, %p122
    %p124 = scmp.ne.s32.totalorder %s112, %s113
    %p125 = scmp.eq.s32.totalorder %s19, 1
    %p126 = por %p124, %p125
    %p128 = scmp.ne.s32.totalorder %s113, %s127
    %p129 = scmp.eq.s32.totalorder %s19, 0
    %p130 = por %p128, %p129
    %s132 = sadd.s32 %s131, 1
    %p135 = scmp.eq.s32.totalorder %s13, 1
    %p136 = scmp.ne.s32.totalorder %s131, %s133
    %p137 = scmp.eq.s32.totalorder %s13, 0
    %p138 = por %p136, %p137
    %p139 = scmp.ne.s32.totalorder %s131, %s133
    %p140 = scmp.eq.s32.totalorder %s18, 1
    %p141 = por %p139, %p140
    %p142 = scmp.ne.s32.totalorder %s133, %s134
    %p143 = scmp.eq.s32.totalorder %s18, 0
    %p144 = por %p142, %p143
    %p145 = scmp.ne.s32.totalorder %s133, %s134
    %p146 = scmp.eq.s32.totalorder %s19, 1
    %p147 = por %p145, %p146
    %p149 = scmp.ne.s32.totalorder %s134, %s148
    %p150 = scmp.eq.s32.totalorder %s19, 0
    %p151 = por %p149, %p150
    %s153 = sadd.s32 %s152, 1
    %p156 = scmp.eq.s32.totalorder %s13, 1
    %p157 = scmp.ne.s32.totalorder %s152, %s154
    %p158 = scmp.eq.s32.totalorder %s13, 0
    %p159 = por %p157, %p158
    %p160 = scmp.ne.s32.totalorder %s152, %s154
    %p161 = scmp.eq.s32.totalorder %s18, 1
    %p162 = por %p160, %p161
    %p163 = scmp.ne.s32.totalorder %s154, %s155
    %p164 = scmp.eq.s32.totalorder %s18, 0
    %p165 = por %p163, %p164
    %p166 = scmp.ne.s32.totalorder %s154, %s155
    %p167 = scmp.eq.s32.totalorder %s19, 1
    %p168 = por %p166, %p167
    %p170 = scmp.ne.s32.totalorder %s155, %s169
    %p171 = scmp.eq.s32.totalorder %s19, 0
    %p172 = por %p170, %p171
    %s173 = ssub.s32 %s13, %s20
    %p174 = scmp.eq.s32.totalorder %s173, 0
    %s176 = sadd.s32 %s175, 1
    %s177 = scalar_select %p174, %s175, %s176
    %p180 = pneg %p174
    %p181 = scmp.eq.s32.totalorder %s13, 1
    %p182 = por %p180, %p181
    %p183 = scmp.ne.s32.totalorder %s175, %s178
    %p184 = scmp.eq.s32.totalorder %s13, 0
    %p185 = por %p183, %p184
    %p186 = scmp.ne.s32.totalorder %s175, %s178
    %p187 = scmp.eq.s32.totalorder %s18, 1
    %p188 = por %p186, %p187
    %p189 = scmp.ne.s32.totalorder %s178, %s179
    %p190 = scmp.eq.s32.totalorder %s18, 0
    %p191 = por %p189, %p190
    %p192 = scmp.ne.s32.totalorder %s178, %s179
    %p193 = scmp.eq.s32.totalorder %s19, 1
    %p194 = por %p192, %p193
    %p196 = scmp.ne.s32.totalorder %s179, %s195
    %p197 = scmp.eq.s32.totalorder %s19, 0
    %p198 = por %p196, %p197
    %p199 = scmp.le.s32.totalorder 1, %s13
    %p200 = scmp.lt.s32.totalorder %s13, 3
    %p201 = pnand %p199, %p200
    %p202 = pneg %p201
    // Predicated region
    $region9: #{mlp_forward.1} parent=5 // pred_check
      _
    $region10: #{mlp_forward.1} parent=5 // pred_check_branch
      %204 = sbr.rel (%p201) target = $region12
    $region11: #{mlp_forward.1} parent=5 // pred_region
      %s205 = ssub.s32 %s13, 1
      // Predicated region
      $region13: #{mlp_forward.1} parent=11 // pred_check
        %p206 = pneg %p60
      $region14: #{mlp_forward.1} parent=11 // pred_check_branch
        %208 = sbr.rel (%p206) target = $region16
      $region15: #{mlp_forward.1} parent=11 // pred_region
        _
      $region16: #{mlp_forward.1} parent=11 // pred_fallthru
        _
      // Predicated region
      $region17: #{mlp_forward.1} parent=11 // pred_check
        %p209 = pneg %p81
      $region18: #{mlp_forward.1} parent=11 // pred_check_branch
        %211 = sbr.rel (%p209) target = $region20
      $region19: #{mlp_forward.1} parent=11 // pred_region
        _
      $region20: #{mlp_forward.1} parent=11 // pred_fallthru
        _
      // Predicated region
      $region21: #{mlp_forward.1} parent=11 // pred_check
        %p212 = pneg %p102
      $region22: #{mlp_forward.1} parent=11 // pred_check_branch
        %214 = sbr.rel (%p212) target = $region24
      $region23: #{mlp_forward.1} parent=11 // pred_region
        _
      $region24: #{mlp_forward.1} parent=11 // pred_fallthru
        _
      // Predicated region
      $region25: #{mlp_forward.1} parent=11 // pred_check
        %p215 = pneg %p123
      $region26: #{mlp_forward.1} parent=11 // pred_check_branch
        %217 = sbr.rel (%p215) target = $region28
      $region27: #{mlp_forward.1} parent=11 // pred_region
        _
      $region28: #{mlp_forward.1} parent=11 // pred_fallthru
        _
      // Predicated region
      $region29: #{mlp_forward.1} parent=11 // pred_check
        %p218 = pneg %p144
      $region30: #{mlp_forward.1} parent=11 // pred_check_branch
        %220 = sbr.rel (%p218) target = $region32
      $region31: #{mlp_forward.1} parent=11 // pred_region
        _
      $region32: #{mlp_forward.1} parent=11 // pred_fallthru
        _
      // Predicated region
      $region33: #{mlp_forward.1} parent=11 // pred_check
        %p221 = pneg %p165
      $region34: #{mlp_forward.1} parent=11 // pred_check_branch
        %223 = sbr.rel (%p221) target = $region36
      $region35: #{mlp_forward.1} parent=11 // pred_region
        _
      $region36: #{mlp_forward.1} parent=11 // pred_fallthru
        _
    $region12: #{mlp_forward.1} parent=5 // pred_fallthru
      _
    %p224 = scmp.lt.s32.totalorder %s13, 2
    // Predicated region
    $region37: #{mlp_forward.1} parent=5 // pred_check
      %p225 = pneg %p224
    $region38: #{mlp_forward.1} parent=5 // pred_check_branch
      %227 = sbr.rel (%p225) target = $region40
    $region39: #{mlp_forward.1} parent=5 // pred_region
      // Predicated region
      $region41: #{mlp_forward.1} parent=39 // pred_check
        %p228 = pneg %p33
      $region42: #{mlp_forward.1} parent=39 // pred_check_branch
        %230 = sbr.rel (%p228) target = $region44
      $region43: #{mlp_forward.1} parent=39 // pred_region
        %s231 = smul.u32 32, %s13
        %p232 = scmp.lt.s32.totalorder %s231, 63
        %s233 = scalar_select %p232, %s231, 63
        %s234 = smul.addr %s233, 8
        %s235 = scalar_lea.vmem %s0, %s234
        %s236 = smul.u32 32, %s13
      $region44: #{mlp_forward.1} parent=39 // pred_fallthru
        _
    $region40: #{mlp_forward.1} parent=5 // pred_fallthru
      _
    %p237 = scmp.le.s32.totalorder 1, %s13
    %p238 = scmp.lt.s32.totalorder %s13, 3
    %p239 = pnand %p237, %p238
    %p240 = pneg %p239
    // Predicated region
    $region45: #{mlp_forward.1} parent=5 // pred_check
      _
    $region46: #{mlp_forward.1} parent=5 // pred_check_branch
      %242 = sbr.rel (%p239) target = $region48
    $region47: #{mlp_forward.1} parent=5 // pred_region
      %s243 = ssub.s32 %s13, 1
      %s244 = smul.u32 32, %s18
      %p245 = scmp.lt.s32.totalorder %s244, 63
      %s246 = scalar_select %p245, %s244, 63
      %s247 = smul.addr %s246, 8
      %s248 = scalar_lea.vmem %s0, %s247
      %p249 = pneg %p39
      %p250 = pneg %p36
      %p251 = pneg %p60
      %p252 = pneg %p57
      %p253 = pneg %p81
      %p254 = pneg %p78
      %p255 = pneg %p102
      %p256 = pneg %p99
      %p257 = pneg %p123
      %p258 = pneg %p120
      %p259 = pneg %p144
      %p260 = pneg %p141
      %p261 = pneg %p165
      %p262 = pneg %p162
      %p263 = pneg %p191
      %p264 = pneg %p188
      %s265 = smul.u32 32, %s18
      %p266 = scmp.lt.s32.totalorder %s265, 63
      %s267 = scalar_select %p266, %s265, 63
      %s268 = smul.addr %s267, 8
      %s269 = scalar_lea.vmem %s7, %s268
      %s270 = smul.u32 32, %s18
      %p271 = scmp.lt.s32.totalorder %s270, 63
      %s272 = scalar_select %p271, %s270, 63
      %s273 = smul.addr %s272, 8
      %s274 = scalar_lea.vmem %s0, %s273
      %s275 = smul.u32 32, %s18
      %s276 = smul.u32 32, %s18
      %p277 = scmp.lt.s32.totalorder %s276, 63
      %s278 = scalar_select %p277, %s276, 63
      %s279 = smul.addr %s278, 8
      %s280 = scalar_lea.vmem %s7, %s279
      %s281 = smul.u32 32, %s18
      %v282 = vld [vmem:[%s1] sm:$0xff]
      %v283 = vld [vmem:[%s1 + $0x8] sm:$0xff]
      %v284 = vld [vmem:[%s1 + $0x10] sm:$0xff]
      %v285 = vld [vmem:[%s1 + $0x18] sm:$0xff]
      %v286 = vld [vmem:[%s2] sm:$0xff]
      %v287 = vld [vmem:[%s2 + $0x8] sm:$0xff]
      %v288 = vld [vmem:[%s2 + $0x10] sm:$0xff]
      %v289 = vld [vmem:[%s2 + $0x18] sm:$0xff]
      %v290 = vld [vmem:[%s3] sm:$0xff]
      %v291 = vld [vmem:[%s3 + $0x8] sm:$0xff]
      %v292 = vld [vmem:[%s3 + $0x10] sm:$0xff]
      %v293 = vld [vmem:[%s3 + $0x18] sm:$0xff]
      %v294 = vld [vmem:[%s4] sm:$0xff]
      %v295 = vld [vmem:[%s4 + $0x8] sm:$0xff]
      %v296 = vld [vmem:[%s4 + $0x10] sm:$0xff]
      %v297 = vld [vmem:[%s4 + $0x18] sm:$0xff]
      %v298 = vld [vmem:[%s5] sm:$0xff]
      %v299 = vld [vmem:[%s6] sm:$0xff]
      %v300 = vld [vmem:[%s274] sm:$0xff]
      %v301 = vld [vmem:[%s274 + $0x8] sm:$0xff]
      %v302 = vld [vmem:[%s274 + $0x10] sm:$0xff]
      %v303 = vld [vmem:[%s274 + $0x18] sm:$0xff]
      %v304 = vld [vmem:[%s274 + $0x20] sm:$0xff]
      %v305 = vld [vmem:[%s274 + $0x28] sm:$0xff]
      %v306 = vld [vmem:[%s274 + $0x30] sm:$0xff]
      %v307 = vld [vmem:[%s274 + $0x38] sm:$0xff]
      %v308 = vld [vmem:[%s274 + $0x40] sm:$0xff]
      %v309 = vld [vmem:[%s274 + $0x48] sm:$0xff]
      %v310 = vld [vmem:[%s274 + $0x50] sm:$0xff]
      %v311 = vld [vmem:[%s274 + $0x58] sm:$0xff]
      %v312 = vld [vmem:[%s274 + $0x60] sm:$0xff]
      %v313 = vld [vmem:[%s274 + $0x68] sm:$0xff]
      %v314 = vld [vmem:[%s274 + $0x70] sm:$0xff]
      %v315 = vld [vmem:[%s274 + $0x78] sm:$0xff]
      %v316 = vld [vmem:[%s274 + $0x80] sm:$0xff]
      %v317 = vld [vmem:[%s274 + $0x88] sm:$0xff]
      %v318 = vld [vmem:[%s274 + $0x90] sm:$0xff]
      %v319 = vld [vmem:[%s274 + $0x98] sm:$0xff]
      %v320 = vld [vmem:[%s274 + $0xa0] sm:$0xff]
      %v321 = vld [vmem:[%s274 + $0xa8] sm:$0xff]
      %v322 = vld [vmem:[%s274 + $0xb0] sm:$0xff]
      %v323 = vld [vmem:[%s274 + $0xb8] sm:$0xff]
      %v324 = vld [vmem:[%s274 + $0xc0] sm:$0xff]
      %v325 = vld [vmem:[%s274 + $0xc8] sm:$0xff]
      %v326 = vld [vmem:[%s274 + $0xd0] sm:$0xff]
      %v327 = vld [vmem:[%s274 + $0xd8] sm:$0xff]
      %v328 = vld [vmem:[%s274 + $0xe0] sm:$0xff]
      %v329 = vld [vmem:[%s274 + $0xe8] sm:$0xff]
      %v330 = vld [vmem:[%s274 + $0xf0] sm:$0xff]
      %v331 = vld [vmem:[%s274 + $0xf8] sm:$0xff]
      %333 = vset.pattern.permute.xlu0 0
      %334 = vperm.xlu0 %333, %v286
      %v335 = vpop.permute.xlu0 %334
      %338 = vset.pattern.permute.xlu0 0
      %339 = vperm.xlu0 %338, %v287
      %v340 = vpop.permute.xlu0 %339
      %343 = vset.pattern.permute.xlu0 0
      %344 = vperm.xlu0 %343, %v288
      %v345 = vpop.permute.xlu0 %344
      %348 = vset.pattern.permute.xlu0 0
      %349 = vperm.xlu0 %348, %v289
      %v350 = vpop.permute.xlu0 %349
      %vm352 = vcmask 130048
      %v354 = vsel %vm352, %v282, 0
      %v357 = vsel %vm352, %v283, 0
      %v360 = vsel %vm352, %v284, 0
      %v363 = vsel %vm352, %v285, 0
      %v366 = vsel %vm352, %v300, 0
      %v369 = vsel %vm352, %v301, 0
      %v372 = vsel %vm352, %v302, 0
      %v375 = vsel %vm352, %v303, 0
      %v378 = vsel %vm352, %v304, 0
      %v381 = vsel %vm352, %v305, 0
      %v384 = vsel %vm352, %v306, 0
      %v387 = vsel %vm352, %v307, 0
      %v390 = vsel %vm352, %v308, 0
      %v393 = vsel %vm352, %v309, 0
      %v396 = vsel %vm352, %v310, 0
      %v399 = vsel %vm352, %v311, 0
      %v402 = vsel %vm352, %v312, 0
      %v405 = vsel %vm352, %v313, 0
      %v408 = vsel %vm352, %v314, 0
      %v411 = vsel %vm352, %v315, 0
      %v414 = vsel %vm352, %v316, 0
      %v417 = vsel %vm352, %v317, 0
      %v420 = vsel %vm352, %v318, 0
      %v423 = vsel %vm352, %v319, 0
      %v426 = vsel %vm352, %v320, 0
      %v429 = vsel %vm352, %v321, 0
      %v432 = vsel %vm352, %v322, 0
      %v435 = vsel %vm352, %v323, 0
      %v438 = vsel %vm352, %v324, 0
      %v441 = vsel %vm352, %v325, 0
      %v444 = vsel %vm352, %v326, 0
      %v447 = vsel %vm352, %v327, 0
      %v450 = vsel %vm352, %v328, 0
      %v453 = vsel %vm352, %v329, 0
      %v456 = vsel %vm352, %v330, 0
      %v459 = vsel %vm352, %v331, 0
      %461 = vmatprep.subr.mxu0 0.0
      %462 = vmatpush1.xpose.msra.mxu0 %v366
      %463 = vmatprep.subr.mxu0 0.0
      %464 = vmatpush1.xpose.msra.mxu0 %v369
      %465 = vmatprep.subr.mxu0 0.0
      %466 = vmatpush1.xpose.msra.mxu0 %v372
      %467 = vmatprep.subr.mxu0 0.0
      %468 = vmatpush1.xpose.msra.mxu0 %v375
      %469 = vmatprep.subr.mxu0 0.0
      %470 = vmatpush1.xpose.msra.mxu0 %v378
      %471 = vmatprep.subr.mxu0 0.0
      %472 = vmatpush1.xpose.msra.mxu0 %v381
      %473 = vmatprep.subr.mxu0 0.0
      %474 = vmatpush1.xpose.msra.mxu0 %v384
      %475 = vmatprep.subr.mxu0 0.0
      %476 = vmatpush1.xpose.msra.mxu0 %v387
      %477 = vmatprep.subr.mxu0 0.0
      %478 = vmatpush1.xpose.msra.mxu0 %v390
      %479 = vmatprep.subr.mxu0 0.0
      %480 = vmatpush1.xpose.msra.mxu0 %v393
      %481 = vmatprep.subr.mxu0 0.0
      %482 = vmatpush1.xpose.msra.mxu0 %v396
      %483 = vmatprep.subr.mxu0 0.0
      %484 = vmatpush1.xpose.msra.mxu0 %v399
      %485 = vmatprep.subr.mxu0 0.0
      %486 = vmatpush1.xpose.msra.mxu0 %v402
      %487 = vmatprep.subr.mxu0 0.0
      %488 = vmatpush1.xpose.msra.mxu0 %v405
      %489 = vmatprep.subr.mxu0 0.0
      %490 = vmatpush1.xpose.msra.mxu0 %v408
      %491 = vmatprep.subr.mxu0 0.0
      %492 = vmatpush1.xpose.msra.mxu0 %v411
      %493 = vmatprep.subr.mxu0 0.0
      %494 = vmatpush1.xpose.msra.mxu0 %v414
      %495 = vmatprep.subr.mxu0 0.0
      %496 = vmatpush1.xpose.msra.mxu0 %v417
      %497 = vmatprep.subr.mxu0 0.0
      %498 = vmatpush1.xpose.msra.mxu0 %v420
      %499 = vmatprep.subr.mxu0 0.0
      %500 = vmatpush1.xpose.msra.mxu0 %v423
      %501 = vmatprep.subr.mxu0 0.0
      %502 = vmatpush1.xpose.msra.mxu0 %v426
      %503 = vmatprep.subr.mxu0 0.0
      %504 = vmatpush1.xpose.msra.mxu0 %v429
      %505 = vmatprep.subr.mxu0 0.0
      %506 = vmatpush1.xpose.msra.mxu0 %v432
      %507 = vmatprep.subr.mxu0 0.0
      %508 = vmatpush1.xpose.msra.mxu0 %v435
      %509 = vmatprep.subr.mxu0 0.0
      %510 = vmatpush1.xpose.msra.mxu0 %v438
      %511 = vmatprep.subr.mxu0 0.0
      %512 = vmatpush1.xpose.msra.mxu0 %v441
      %513 = vmatprep.subr.mxu0 0.0
      %514 = vmatpush1.xpose.msra.mxu0 %v444
      %515 = vmatprep.subr.mxu0 0.0
      %516 = vmatpush1.xpose.msra.mxu0 %v447
      %517 = vmatprep.subr.mxu0 0.0
      %518 = vmatpush1.xpose.msra.mxu0 %v450
      %519 = vmatprep.subr.mxu0 0.0
      %520 = vmatpush1.xpose.msra.mxu0 %v453
      %521 = vmatprep.subr.mxu0 0.0
      %522 = vmatpush1.xpose.msra.mxu0 %v456
      %523 = vmatprep.subr.mxu0 0.0
      %524 = vmatpush1.xpose.msra.mxu0 %v459
      %525 = vmatprep.mubr.f32.mxu0 0.0
      %526 = vmatmul.mubr.f32.gmra.mrb[0].mxu0 %v354
      %v527 = vpop.f32.mrb[0].mxu0
      %v528 = vadd.f32 %v335, %v527
      %v529 = vpop.f32.mrb[0].mxu0
      %v530 = vadd.f32 %v335, %v529
      %531 = vmatprep.mubr.f32.mxu0 0.0
      %532 = vmatmul.mubr.f32.gmra.mrb[0].mxu0 %v357
      %v533 = vpop.f32.mrb[0].mxu0
      %v534 = vadd.f32 %v340, %v533
      %v535 = vpop.f32.mrb[0].mxu0
      %v536 = vadd.f32 %v340, %v535
      %537 = vmatprep.mubr.f32.mxu0 0.0
      %538 = vmatmul.mubr.f32.gmra.mrb[0].mxu0 %v360
      %v539 = vpop.f32.mrb[0].mxu0
      %v540 = vadd.f32 %v345, %v539
      %v541 = vpop.f32.mrb[0].mxu0
      %v542 = vadd.f32 %v345, %v541
      %543 = vmatprep.mubr.f32.mxu0 0.0
      %544 = vmatmul.mubr.f32.gmra.mrb[0].mxu0 %v363
      %v545 = vpop.f32.mrb[0].mxu0
      %v546 = vadd.f32 %v350, %v545
      %v547 = vpop.f32.mrb[0].mxu0
      %v548 = vadd.f32 %v350, %v547
      %549 = vdwg.mxu0
      %v550 = vmul.f32 %v528, 0.5
      %v551 = vmul.f32 %v530, 0.5
      %v552 = vmul.f32 %v534, 0.5
      %v553 = vmul.f32 %v536, 0.5
      %v554 = vmul.f32 %v540, 0.5
      %v555 = vmul.f32 %v542, 0.5
      %v556 = vmul.f32 %v546, 0.5
      %v557 = vmul.f32 %v548, 0.5
      %v558 = vtanh.pop %v550
      %v559 = vtanh.pop %v551
      %v560 = vtanh.pop %v552
      %v561 = vtanh.pop %v553
      %v562 = vtanh.pop %v554
      %v563 = vtanh.pop %v555
      %v564 = vtanh.pop %v556
      %v565 = vtanh.pop %v557
      %v566 = vmul.f32 %v558, 0.5
      %v567 = vmul.f32 %v559, 0.5
      %v568 = vmul.f32 %v560, 0.5
      %v569 = vmul.f32 %v561, 0.5
      %v570 = vmul.f32 %v562, 0.5
      %v571 = vmul.f32 %v563, 0.5
      %v572 = vmul.f32 %v564, 0.5
      %v573 = vmul.f32 %v565, 0.5
      %v574 = vadd.f32 %v566, 0.5
      %v575 = vadd.f32 %v567, 0.5
      %v576 = vadd.f32 %v568, 0.5
      %v577 = vadd.f32 %v569, 0.5
      %v578 = vadd.f32 %v570, 0.5
      %v579 = vadd.f32 %v571, 0.5
      %v580 = vadd.f32 %v572, 0.5
      %v581 = vadd.f32 %v573, 0.5
      %583 = vset.pattern.permute.xlu0 0
      %584 = vperm.xlu0 %583, %v294
      %v585 = vpop.permute.xlu0 %584
      %588 = vset.pattern.permute.xlu0 0
      %589 = vperm.xlu0 %588, %v295
      %v590 = vpop.permute.xlu0 %589
      %593 = vset.pattern.permute.xlu0 0
      %594 = vperm.xlu0 %593, %v296
      %v595 = vpop.permute.xlu0 %594
      %598 = vset.pattern.permute.xlu0 0
      %599 = vperm.xlu0 %598, %v297
      %v600 = vpop.permute.xlu0 %599
      %vm602 = vcmask 261120
      %v604 = vsel %vm602, %v290, 0
      %v607 = vsel %vm602, %v291, 0
      %v610 = vsel %vm602, %v292, 0
      %v613 = vsel %vm602, %v293, 0
      %615 = vmatprep.subr.mxu0 %v575
      %616 = vmatpush1.msra.mxu0 %v574
      %617 = vmatprep.subr.mxu0 %v577
      %618 = vmatpush1.msra.mxu0 %v576
      %619 = vmatprep.subr.mxu0 %v579
      %620 = vmatpush1.msra.mxu0 %v578
      %621 = vmatprep.subr.mxu0 %v581
      %622 = vmatpush1.msra.mxu0 %v580
      %623 = vmatprep.subr.mxu0 0.0
      %624 = vmatpush1.msra.mxu0 0.0
      %625 = vmatprep.subr.mxu0 0.0
      %626 = vmatpush1.msra.mxu0 0.0
      %627 = vmatprep.subr.mxu0 0.0
      %628 = vmatpush1.msra.mxu0 0.0
      %629 = vmatprep.subr.mxu0 0.0
      %630 = vmatpush1.msra.mxu0 0.0
      %631 = vmatprep.subr.mxu0 0.0
      %632 = vmatpush1.msra.mxu0 0.0
      %633 = vmatprep.subr.mxu0 0.0
      %634 = vmatpush1.msra.mxu0 0.0
      %635 = vmatprep.subr.mxu0 0.0
      %636 = vmatpush1.msra.mxu0 0.0
      %637 = vmatprep.subr.mxu0 0.0
      %638 = vmatpush1.msra.mxu0 0.0
      %639 = vmatprep.subr.mxu0 0.0
      %640 = vmatpush1.msra.mxu0 0.0
      %641 = vmatprep.subr.mxu0 0.0
      %642 = vmatpush1.msra.mxu0 0.0
      %643 = vmatprep.subr.mxu0 0.0
      %644 = vmatpush1.msra.mxu0 0.0
      %645 = vmatprep.subr.mxu0 0.0
      %646 = vmatpush1.msra.mxu0 0.0
      %647 = vmatprep.subr.mxu0 0.0
      %648 = vmatpush1.msra.mxu0 0.0
      %649 = vmatprep.subr.mxu0 0.0
      %650 = vmatpush1.msra.mxu0 0.0
      %651 = vmatprep.subr.mxu0 0.0
      %652 = vmatpush1.msra.mxu0 0.0
      %653 = vmatprep.subr.mxu0 0.0
      %654 = vmatpush1.msra.mxu0 0.0
      %655 = vmatprep.subr.mxu0 0.0
      %656 = vmatpush1.msra.mxu0 0.0
      %657 = vmatprep.subr.mxu0 0.0
      %658 = vmatpush1.msra.mxu0 0.0
      %659 = vmatprep.subr.mxu0 0.0
      %660 = vmatpush1.msra.mxu0 0.0
      %661 = vmatprep.subr.mxu0 0.0
      %662 = vmatpush1.msra.mxu0 0.0
      %663 = vmatprep.subr.mxu0 0.0
      %664 = vmatpush1.msra.mxu0 0.0
      %665 = vmatprep.subr.mxu0 0.0
      %666 = vmatpush1.msra.mxu0 0.0
      %667 = vmatprep.subr.mxu0 0.0
      %668 = vmatpush1.msra.mxu0 0.0
      %669 = vmatprep.subr.mxu0 0.0
      %670 = vmatpush1.msra.mxu0 0.0
      %671 = vmatprep.subr.mxu0 0.0
      %672 = vmatpush1.msra.mxu0 0.0
      %673 = vmatprep.subr.mxu0 0.0
      %674 = vmatpush1.msra.mxu0 0.0
      %675 = vmatprep.subr.mxu0 0.0
      %676 = vmatpush1.msra.mxu0 0.0
      %677 = vmatprep.subr.mxu0 0.0
      %678 = vmatpush1.msra.mxu0 0.0
      %679 = vmatprep.mubr.f32.mxu0 0.0
      %680 = vmatmul.mubr.f32.gmra.mrb[0].mxu0 %v604
      %v681 = vpop.f32.mrb[0].mxu0
      %v682 = vadd.f32 %v585, %v681
      %v683 = vpop.f32.mrb[0].mxu0
      %v684 = vadd.f32 %v585, %v683
      %685 = vmatprep.mubr.f32.mxu0 0.0
      %686 = vmatmul.mubr.f32.gmra.mrb[0].mxu0 %v607
      %v687 = vpop.f32.mrb[0].mxu0
      %v688 = vadd.f32 %v590, %v687
      %v689 = vpop.f32.mrb[0].mxu0
      %v690 = vadd.f32 %v590, %v689
      %691 = vmatprep.mubr.f32.mxu0 0.0
      %692 = vmatmul.mubr.f32.gmra.mrb[0].mxu0 %v610
      %v693 = vpop.f32.mrb[0].mxu0
      %v694 = vadd.f32 %v595, %v693
      %v695 = vpop.f32.mrb[0].mxu0
      %v696 = vadd.f32 %v595, %v695
      %697 = vmatprep.mubr.f32.mxu0 0.0
      %698 = vmatmul.mubr.f32.gmra.mrb[0].mxu0 %v613
      %v699 = vpop.f32.mrb[0].mxu0
      %v700 = vadd.f32 %v600, %v699
      %v701 = vpop.f32.mrb[0].mxu0
      %v702 = vadd.f32 %v600, %v701
      %703 = vdwg.mxu0
      %v704 = vmul.f32 %v682, 0.5
      %v705 = vmul.f32 %v684, 0.5
      %v706 = vmul.f32 %v688, 0.5
      %v707 = vmul.f32 %v690, 0.5
      %v708 = vmul.f32 %v694, 0.5
      %v709 = vmul.f32 %v696, 0.5
      %v710 = vmul.f32 %v700, 0.5
      %v711 = vmul.f32 %v702, 0.5
      %v712 = vtanh.pop %v704
      %v713 = vtanh.pop %v705
      %v714 = vtanh.pop %v706
      %v715 = vtanh.pop %v707
      %v716 = vtanh.pop %v708
      %v717 = vtanh.pop %v709
      %v718 = vtanh.pop %v710
      %v719 = vtanh.pop %v711
      %v720 = vmul.f32 %v712, 0.5
      %v721 = vmul.f32 %v713, 0.5
      %v722 = vmul.f32 %v714, 0.5
      %v723 = vmul.f32 %v715, 0.5
      %v724 = vmul.f32 %v716, 0.5
      %v725 = vmul.f32 %v717, 0.5
      %v726 = vmul.f32 %v718, 0.5
      %v727 = vmul.f32 %v719, 0.5
      %v728 = vadd.f32 %v720, 0.5
      %v729 = vadd.f32 %v721, 0.5
      %v730 = vadd.f32 %v722, 0.5
      %v731 = vadd.f32 %v723, 0.5
      %v732 = vadd.f32 %v724, 0.5
      %v733 = vadd.f32 %v725, 0.5
      %v734 = vadd.f32 %v726, 0.5
      %v735 = vadd.f32 %v727, 0.5
      %737 = vset.pattern.permute.xlu0 0
      %738 = vperm.xlu0 %737, %v299
      %v739 = vpop.permute.xlu0 %738
      %v742 = vsel %vm602, %v298, 0
      %744 = vmatprep.subr.mxu0 %v729
      %745 = vmatpush1.msra.mxu0 %v728
      %746 = vmatprep.subr.mxu0 %v731
      %747 = vmatpush1.msra.mxu0 %v730
      %748 = vmatprep.subr.mxu0 %v733
      %749 = vmatpush1.msra.mxu0 %v732
      %750 = vmatprep.subr.mxu0 %v735
      %751 = vmatpush1.msra.mxu0 %v734
      %752 = vmatprep.subr.mxu0 0.0
      %753 = vmatpush1.msra.mxu0 0.0
      %754 = vmatprep.subr.mxu0 0.0
      %755 = vmatpush1.msra.mxu0 0.0
      %756 = vmatprep.subr.mxu0 0.0
      %757 = vmatpush1.msra.mxu0 0.0
      %758 = vmatprep.subr.mxu0 0.0
      %759 = vmatpush1.msra.mxu0 0.0
      %760 = vmatprep.subr.mxu0 0.0
      %761 = vmatpush1.msra.mxu0 0.0
      %762 = vmatprep.subr.mxu0 0.0
      %763 = vmatpush1.msra.mxu0 0.0
      %764 = vmatprep.subr.mxu0 0.0
      %765 = vmatpush1.msra.mxu0 0.0
      %766 = vmatprep.subr.mxu0 0.0
      %767 = vmatpush1.msra.mxu0 0.0
      %768 = vmatprep.subr.mxu0 0.0
      %769 = vmatpush1.msra.mxu0 0.0
      %770 = vmatprep.subr.mxu0 0.0
      %771 = vmatpush1.msra.mxu0 0.0
      %772 = vmatprep.subr.mxu0 0.0
      %773 = vmatpush1.msra.mxu0 0.0
      %774 = vmatprep.subr.mxu0 0.0
      %775 = vmatpush1.msra.mxu0 0.0
      %776 = vmatprep.subr.mxu0 0.0
      %777 = vmatpush1.msra.mxu0 0.0
      %778 = vmatprep.subr.mxu0 0.0
      %779 = vmatpush1.msra.mxu0 0.0
      %780 = vmatprep.subr.mxu0 0.0
      %781 = vmatpush1.msra.mxu0 0.0
      %782 = vmatprep.subr.mxu0 0.0
      %783 = vmatpush1.msra.mxu0 0.0
      %784 = vmatprep.subr.mxu0 0.0
      %785 = vmatpush1.msra.mxu0 0.0
      %786 = vmatprep.subr.mxu0 0.0
      %787 = vmatpush1.msra.mxu0 0.0
      %788 = vmatprep.subr.mxu0 0.0
      %789 = vmatpush1.msra.mxu0 0.0
      %790 = vmatprep.subr.mxu0 0.0
      %791 = vmatpush1.msra.mxu0 0.0
      %792 = vmatprep.subr.mxu0 0.0
      %793 = vmatpush1.msra.mxu0 0.0
      %794 = vmatprep.subr.mxu0 0.0
      %795 = vmatpush1.msra.mxu0 0.0
      %796 = vmatprep.subr.mxu0 0.0
      %797 = vmatpush1.msra.mxu0 0.0
      %798 = vmatprep.subr.mxu0 0.0
      %799 = vmatpush1.msra.mxu0 0.0
      %800 = vmatprep.subr.mxu0 0.0
      %801 = vmatpush1.msra.mxu0 0.0
      %802 = vmatprep.subr.mxu0 0.0
      %803 = vmatpush1.msra.mxu0 0.0
      %804 = vmatprep.subr.mxu0 0.0
      %805 = vmatpush1.msra.mxu0 0.0
      %806 = vmatprep.subr.mxu0 0.0
      %807 = vmatpush1.msra.mxu0 0.0
      %808 = vmatprep.mubr.f32.mxu0 0.0
      %809 = vmatmul.mubr.f32.gmra.mrb[0].mxu0 %v742
      %v810 = vpop.f32.mrb[0].mxu0
      %v811 = vadd.f32 %v739, %v810
      %v812 = vpop.f32.mrb[0].mxu0
      %v813 = vadd.f32 %v739, %v812
      %814 = vdwg.mxu0
      %815 = vxpose.xlu0.b32.start [1/16] %v811, 128
      %816 = vxpose.xlu0.b32.cont [2/16] 0.0, 128
      %817 = vxpose.xlu0.b32.cont [3/16] 0.0, 128
      %818 = vxpose.xlu0.b32.cont [4/16] 0.0, 128
      %819 = vxpose.xlu0.b32.cont [5/16] 0.0, 128
      %820 = vxpose.xlu0.b32.cont [6/16] 0.0, 128
      %821 = vxpose.xlu0.b32.cont [7/16] 0.0, 128
      %822 = vxpose.xlu0.b32.cont [8/16] 0.0, 128
      %823 = vxpose.xlu0.b32.cont [9/16] 0.0, 128
      %824 = vxpose.xlu0.b32.cont [10/16] 0.0, 128
      %825 = vxpose.xlu0.b32.cont [11/16] 0.0, 128
      %826 = vxpose.xlu0.b32.cont [12/16] 0.0, 128
      %827 = vxpose.xlu0.b32.cont [13/16] 0.0, 128
      %828 = vxpose.xlu0.b32.cont [14/16] 0.0, 128
      %829 = vxpose.xlu0.b32.cont [15/16] 0.0, 128
      %830 = vxpose.xlu0.b32.end [16/16] 0.0, 128
      %v831 = vpop.trf.xlu0
      %v832 = vpop.trf.xlu0
      %v833 = vpop.trf.xlu0
      %v834 = vpop.trf.xlu0
      %v835 = vpop.trf.xlu0
      %v836 = vpop.trf.xlu0
      %v837 = vpop.trf.xlu0
      %v838 = vpop.trf.xlu0
      %v839 = vpop.trf.xlu0
      %v840 = vpop.trf.xlu0
      %v841 = vpop.trf.xlu0
      %v842 = vpop.trf.xlu0
      %v843 = vpop.trf.xlu0
      %v844 = vpop.trf.xlu0
      %v845 = vpop.trf.xlu0
      %v846 = vpop.trf.xlu0
      %847 = vxpose.xlu0.b32.start [1/16] %v813, 128
      %848 = vxpose.xlu0.b32.cont [2/16] 0.0, 128
      %849 = vxpose.xlu0.b32.cont [3/16] 0.0, 128
      %850 = vxpose.xlu0.b32.cont [4/16] 0.0, 128
      %851 = vxpose.xlu0.b32.cont [5/16] 0.0, 128
      %852 = vxpose.xlu0.b32.cont [6/16] 0.0, 128
      %853 = vxpose.xlu0.b32.cont [7/16] 0.0, 128
      %854 = vxpose.xlu0.b32.cont [8/16] 0.0, 128
      %855 = vxpose.xlu0.b32.cont [9/16] 0.0, 128
      %856 = vxpose.xlu0.b32.cont [10/16] 0.0, 128
      %857 = vxpose.xlu0.b32.cont [11/16] 0.0, 128
      %858 = vxpose.xlu0.b32.cont [12/16] 0.0, 128
      %859 = vxpose.xlu0.b32.cont [13/16] 0.0, 128
      %860 = vxpose.xlu0.b32.cont [14/16] 0.0, 128
      %861 = vxpose.xlu0.b32.cont [15/16] 0.0, 128
      %862 = vxpose.xlu0.b32.end [16/16] 0.0, 128
      %v863 = vpop.trf.xlu0
      %v864 = vpop.trf.xlu0
      %v865 = vpop.trf.xlu0
      %v866 = vpop.trf.xlu0
      %v867 = vpop.trf.xlu0
      %v868 = vpop.trf.xlu0
      %v869 = vpop.trf.xlu0
      %v870 = vpop.trf.xlu0
      %v871 = vpop.trf.xlu0
      %v872 = vpop.trf.xlu0
      %v873 = vpop.trf.xlu0
      %v874 = vpop.trf.xlu0
      %v875 = vpop.trf.xlu0
      %v876 = vpop.trf.xlu0
      %v877 = vpop.trf.xlu0
      %v878 = vpop.trf.xlu0
      %vm879 = vcmask 64512
      %880 = vst.msk [vmem:[%s280] sm:$0xff] %vm879, %v831
      %881 = vst.msk [vmem:[%s280 + $0x8] sm:$0xff] %vm879, %v832
      %882 = vst.msk [vmem:[%s280 + $0x10] sm:$0xff] %vm879, %v833
      %883 = vst.msk [vmem:[%s280 + $0x18] sm:$0xff] %vm879, %v834
      %884 = vst.msk [vmem:[%s280 + $0x20] sm:$0xff] %vm879, %v835
      %885 = vst.msk [vmem:[%s280 + $0x28] sm:$0xff] %vm879, %v836
      %886 = vst.msk [vmem:[%s280 + $0x30] sm:$0xff] %vm879, %v837
      %887 = vst.msk [vmem:[%s280 + $0x38] sm:$0xff] %vm879, %v838
      %888 = vst.msk [vmem:[%s280 + $0x40] sm:$0xff] %vm879, %v839
      %889 = vst.msk [vmem:[%s280 + $0x48] sm:$0xff] %vm879, %v840
      %890 = vst.msk [vmem:[%s280 + $0x50] sm:$0xff] %vm879, %v841
      %891 = vst.msk [vmem:[%s280 + $0x58] sm:$0xff] %vm879, %v842
      %892 = vst.msk [vmem:[%s280 + $0x60] sm:$0xff] %vm879, %v843
      %893 = vst.msk [vmem:[%s280 + $0x68] sm:$0xff] %vm879, %v844
      %894 = vst.msk [vmem:[%s280 + $0x70] sm:$0xff] %vm879, %v845
      %895 = vst.msk [vmem:[%s280 + $0x78] sm:$0xff] %vm879, %v846
      %896 = vst.msk [vmem:[%s280 + $0x80] sm:$0xff] %vm879, %v863
      %897 = vst.msk [vmem:[%s280 + $0x88] sm:$0xff] %vm879, %v864
      %898 = vst.msk [vmem:[%s280 + $0x90] sm:$0xff] %vm879, %v865
      %899 = vst.msk [vmem:[%s280 + $0x98] sm:$0xff] %vm879, %v866
      %900 = vst.msk [vmem:[%s280 + $0xa0] sm:$0xff] %vm879, %v867
      %901 = vst.msk [vmem:[%s280 + $0xa8] sm:$0xff] %vm879, %v868
      %902 = vst.msk [vmem:[%s280 + $0xb0] sm:$0xff] %vm879, %v869
      %903 = vst.msk [vmem:[%s280 + $0xb8] sm:$0xff] %vm879, %v870
      %904 = vst.msk [vmem:[%s280 + $0xc0] sm:$0xff] %vm879, %v871
      %905 = vst.msk [vmem:[%s280 + $0xc8] sm:$0xff] %vm879, %v872
      %906 = vst.msk [vmem:[%s280 + $0xd0] sm:$0xff] %vm879, %v873
      %907 = vst.msk [vmem:[%s280 + $0xd8] sm:$0xff] %vm879, %v874
      %908 = vst.msk [vmem:[%s280 + $0xe0] sm:$0xff] %vm879, %v875
      %909 = vst.msk [vmem:[%s280 + $0xe8] sm:$0xff] %vm879, %v876
      %910 = vst.msk [vmem:[%s280 + $0xf0] sm:$0xff] %vm879, %v877
      %911 = vst.msk [vmem:[%s280 + $0xf8] sm:$0xff] %vm879, %v878
      %s912 = smul.u32 32, %s18
      %p913 = scmp.lt.s32.totalorder %s912, 63
      %s914 = scalar_select %p913, %s912, 63
      %s915 = smul.addr %s914, 8
      %s916 = scalar_lea.vmem %s7, %s915
      // Predicated region
      $region49: #{mlp_forward.1} parent=47 // pred_check
        %p917 = pneg %p188
      $region50: #{mlp_forward.1} parent=47 // pred_check_branch
        %919 = sbr.rel (%p917) target = $region52
      $region51: #{mlp_forward.1} parent=47 // pred_region
        %s920 = smul.u32 32, %s18
      $region52: #{mlp_forward.1} parent=47 // pred_fallthru
        _
    $region48: #{mlp_forward.1} parent=5 // pred_fallthru
      _
    %p921 = scmp.le.s32.totalorder 2, %s13
    // Predicated region
    $region53: #{mlp_forward.1} parent=5 // pred_check
      %p922 = pneg %p921
    $region54: #{mlp_forward.1} parent=5 // pred_check_branch
      %924 = sbr.rel (%p922) target = $region56
    $region55: #{mlp_forward.1} parent=5 // pred_region
      %s925 = ssub.s32 %s13, 2
      // Predicated region
      $region57: #{mlp_forward.1} parent=55 // pred_check
        %p926 = pneg %p194
      $region58: #{mlp_forward.1} parent=55 // pred_check_branch
        %928 = sbr.rel (%p926) target = $region60
      $region59: #{mlp_forward.1} parent=55 // pred_region
        %s929 = smul.u32 32, %s19
        %p930 = scmp.lt.s32.totalorder %s929, 63
        %s931 = scalar_select %p930, %s929, 63
        %s932 = smul.addr %s931, 8
        %s933 = scalar_lea.vmem %s7, %s932
      $region60: #{mlp_forward.1} parent=55 // pred_fallthru
        _
    $region56: #{mlp_forward.1} parent=5 // pred_fallthru
      _
  $region6: #{mlp_forward.1} parent=0 // loop_footer
    %s17 = sadd.s32 1, %s13
  $region7: #{mlp_forward.1} parent=0 // loop_footer_branch
    %12 = sbr.rel target = $region3
  $region8: #{mlp_forward.1} parent=0 // loop_exit
    _

</llo_original>
